<compile_context>
chip_gen: v7x
topology: tpu7x:2x2x1
jax: 0.10.0
libtpu: 0.0.40
codegen_flags: <defaults>
</compile_context>

<pallas_src>
import functools
import math

import jax
import jax.numpy as jnp
from jax.experimental import pallas as pl
from jax.experimental.pallas import tpu as pltpu

_LANE = 128  # TPU vreg lane width; all kernel-internal N dims are padded to it.


# ----------------------------------------------------------------------------
# Fused Pallas kernel: GCN layer 1 + GCN layer 2 + gathers + prediction head
# ----------------------------------------------------------------------------
def _fused_gcn_kernel(adj_ref, movie_ref, user_ref, um_ref,
                      w1_ref, b1_ref, w2_ref, b2_ref,
                      wp1_ref, wp2_ref, bp_ref, out_ref):
    adj = adj_ref[...]                                     # (N, N) f32

    # ---- GCN layer 1: h1 = relu(adj @ (movie @ W1) + b1) ----
    s1 = jnp.dot(movie_ref[...], w1_ref[...],
                 preferred_element_type=jnp.float32)       # (N, 128)
    h1 = jnp.dot(adj, s1, preferred_element_type=jnp.float32) + b1_ref[...]
    h1 = jnp.maximum(h1, 0.0)

    # ---- GCN layer 2: h2 = adj @ (h1 @ W2) + b2 ----
    s2 = jnp.dot(h1, w2_ref[...], preferred_element_type=jnp.float32)
    h2 = jnp.dot(adj, s2, preferred_element_type=jnp.float32) + b2_ref[...]

    # ---- row gathers via one-hot matmuls (MXU-friendly, no dynamic gather) --
    um = um_ref[...]                                       # (B, 2) int32, 1-indexed
    b = um.shape[0]
    movie_idx = um[:, 1:2] - 1                             # (B, 1)
    user_idx = um[:, 0:1] - 1                              # (B, 1)
    n_nodes = adj_ref.shape[0]
    n_users = user_ref.shape[0]
    oh_m = (jax.lax.broadcasted_iota(jnp.int32, (b, n_nodes), 1)
            == movie_idx).astype(jnp.float32)              # (B, N)
    oh_u = (jax.lax.broadcasted_iota(jnp.int32, (b, n_users), 1)
            == user_idx).astype(jnp.float32)               # (B, U_rows)
    x1 = jnp.dot(oh_m, h2, preferred_element_type=jnp.float32)          # (B, 128)
    x2 = jnp.dot(oh_u, user_ref[...], preferred_element_type=jnp.float32)  # (B, u_in)

    # ---- prediction head: sigmoid(cat(x1, x2) @ Wp + bp) --------------------
    # cat(x1, x2) @ [Wp1; Wp2] == x1 @ Wp1 + x2 @ Wp2  (avoids in-kernel concat)
    z = (jnp.dot(x1, wp1_ref[...], preferred_element_type=jnp.float32)
         + jnp.dot(x2, wp2_ref[...], preferred_element_type=jnp.float32)
         + bp_ref[...])                                    # (B, 128), col 0 real
    out_ref[...] = (1.0 / (1.0 + jnp.exp(-z))).astype(out_ref.dtype)


# ----------------------------------------------------------------------------
# Parameters (PyTorch-style init) padded to 128-lane-dense shapes at setup time
# ----------------------------------------------------------------------------
def _pad2d(a, rows=None, cols=None):
    r = 0 if rows is None else rows - a.shape[0]
    c = 0 if cols is None else cols - a.shape[1]
    return jnp.pad(a, ((0, r), (0, c)))


def init_state(key, n_feature, n_hidden, n_output, u_input, movie, user):
    k1, k2, k3, k4, k5, k6 = jax.random.split(key, 6)
    std1 = 1.0 / math.sqrt(n_hidden)
    std2 = 1.0 / math.sqrt(n_output)
    std3 = 1.0 / math.sqrt(n_output + u_input)  # nn.Linear-style bound
    gc1_w = jax.random.uniform(k1, (n_feature, n_hidden), jnp.float32, -std1, std1)
    gc1_b = jax.random.uniform(k2, (n_hidden,), jnp.float32, -std1, std1)
    gc2_w = jax.random.uniform(k3, (n_hidden, n_output), jnp.float32, -std2, std2)
    gc2_b = jax.random.uniform(k4, (n_output,), jnp.float32, -std2, std2)
    pre_w = jax.random.uniform(k5, (n_output + u_input, 1), jnp.float32, -std3, std3)
    pre_b = jax.random.uniform(k6, (1,), jnp.float32, -std3, std3)
    # Zero-padding the "output" dims to 128 is exact: padded hidden columns are
    # identically zero through relu/layer-2 and contribute nothing downstream.
    return {
        "movie": movie,                                            # (N, F)
        "user": user,                                              # (U_rows, u_in)
        "gc1_w": _pad2d(gc1_w, cols=_LANE),                        # (F, 128)
        "gc1_b": _pad2d(gc1_b.reshape(1, -1), cols=_LANE),         # (1, 128)
        "gc2_w": _pad2d(gc2_w, rows=_LANE, cols=_LANE),            # (128, 128)
        "gc2_b": _pad2d(gc2_b.reshape(1, -1), cols=_LANE),         # (1, 128)
        "pre_w1": _pad2d(pre_w[:n_output, :], rows=_LANE, cols=_LANE),  # (128, 128)
        "pre_w2": _pad2d(pre_w[n_output:, :], cols=_LANE),         # (u_in, 128)
        "pre_b": _pad2d(pre_b.reshape(1, 1), cols=_LANE),          # (1, 128)
    }


# ----------------------------------------------------------------------------
# Forward wrapper (single pallas_call) and a pure-JAX reference
# ----------------------------------------------------------------------------
@jax.jit
def model_forward(state, adj, user_movie):
    batch = user_movie.shape[0]
    vmem = pl.BlockSpec(memory_space=pltpu.MemorySpace.VMEM)
    r_wide = pl.pallas_call(
        _fused_gcn_kernel,
        out_shape=jax.ShapeDtypeStruct((batch, _LANE), jnp.float32),
        in_specs=[vmem] * 11,
        out_specs=vmem,
    )(adj, state["movie"], state["user"], user_movie,
      state["gc1_w"], state["gc1_b"], state["gc2_w"], state["gc2_b"],
      state["pre_w1"], state["pre_w2"], state["pre_b"])
    return r_wide[:, :1]   # column 0 carries the prediction; rest is lane padding


@jax.jit
def reference_forward(state, adj, user_movie):
    dot = functools.partial(jnp.dot, precision=jax.lax.Precision.HIGHEST)
    h1 = jnp.maximum(dot(adj, dot(state["movie"], state["gc1_w"])) + state["gc1_b"], 0.0)
    h2 = dot(adj, dot(h1, state["gc2_w"])) + state["gc2_b"]
    x1 = h2[user_movie[:, 1] - 1, :]
    x2 = state["user"][user_movie[:, 0] - 1, :]
    z = dot(x1, state["pre_w1"]) + dot(x2, state["pre_w2"]) + state["pre_b"]
    return jax.nn.sigmoid(z)[:, :1]


# ----------------------------------------------------------------------------
# Main
# ----------------------------------------------------------------------------
if __name__ == "__main__":
    # Small synthetic shapes consistent with the module.
    N_MOVIES = 64     # graph nodes
    N_USERS = 32
    N_FEATURE = 32
    N_HIDDEN = 32
    N_OUTPUT = 16
    U_INPUT = 16
    BATCH = 8

    key = jax.random.PRNGKey(0)
    kp, km, ku, ka, ki1, ki2 = jax.random.split(key, 6)

    movie = jax.random.normal(km, (N_MOVIES, N_FEATURE), jnp.float32)
    user = jax.random.normal(ku, (N_USERS, U_INPUT), jnp.float32)

    state = init_state(kp, N_FEATURE, N_HIDDEN, N_OUTPUT, U_INPUT, movie, user)

    # Dense (row-normalised) adjacency for the GCN.
    adj_raw = (jax.random.uniform(ka, (N_MOVIES, N_MOVIES)) < 0.1).astype(jnp.float32)
    adj = adj_raw + jnp.eye(N_MOVIES, dtype=jnp.float32)
    adj = adj / jnp.sum(adj, axis=1, keepdims=True)

    # user_movie: column 0 = user id (1-indexed), column 1 = movie id (1-indexed).
    uid = jax.random.randint(ki1, (BATCH, 1), 1, N_USERS + 1)
    mid = jax.random.randint(ki2, (BATCH, 1), 1, N_MOVIES + 1)
    user_movie = jnp.concatenate([uid, mid], axis=1).astype(jnp.int32)

    r = jax.block_until_ready(model_forward(state, adj, user_movie))
    r_ref = jax.block_until_ready(reference_forward(state, adj, user_movie))

    assert r.shape == (BATCH, 1)
    assert bool(jnp.all(jnp.isfinite(r)))
    assert bool(jnp.all((r > 0.0) & (r < 1.0)))
    max_err = float(jnp.max(jnp.abs(r - r_ref)))
    assert max_err < 2e-3, f"mismatch vs reference: {max_err}"

    print("KERNEL_OK")
</pallas_src>

<mosaic_0001>
module attributes {stable_mosaic.version = 11 : i64} {
  func.func @_fused_gcn_kernel(%arg0: memref<64x64xf32, #tpu.memory_space<vmem>>, %arg1: memref<64x32xf32, #tpu.memory_space<vmem>>, %arg2: memref<32x16xf32, #tpu.memory_space<vmem>>, %arg3: memref<8x2xi32, #tpu.memory_space<vmem>>, %arg4: memref<32x128xf32, #tpu.memory_space<vmem>>, %arg5: memref<1x128xf32, #tpu.memory_space<vmem>>, %arg6: memref<128x128xf32, #tpu.memory_space<vmem>>, %arg7: memref<1x128xf32, #tpu.memory_space<vmem>>, %arg8: memref<128x128xf32, #tpu.memory_space<vmem>>, %arg9: memref<16x128xf32, #tpu.memory_space<vmem>>, %arg10: memref<1x128xf32, #tpu.memory_space<vmem>>, %arg11: memref<8x128xf32, #tpu.memory_space<vmem>>) attributes {dimension_semantics = [], scalar_prefetch = 0 : i64, scratch_operands = 0 : i64, tpu.core_type = #tpu.core_type<tc>} {
    %c0 = arith.constant 0 : index
    %c0_0 = arith.constant 0 : index
    %0 = vector.load %arg0[%c0, %c0_0] : memref<64x64xf32, #tpu.memory_space<vmem>>, vector<64x64xf32>
    %c0_1 = arith.constant 0 : index
    %c0_2 = arith.constant 0 : index
    %1 = vector.load %arg1[%c0_1, %c0_2] : memref<64x32xf32, #tpu.memory_space<vmem>>, vector<64x32xf32>
    %c0_3 = arith.constant 0 : index
    %c0_4 = arith.constant 0 : index
    %2 = vector.load %arg4[%c0_3, %c0_4] : memref<32x128xf32, #tpu.memory_space<vmem>>, vector<32x128xf32>
    %cst = arith.constant dense<0.000000e+00> : vector<64x128xf32>
    %3 = tpu.matmul %1, %2, %cst {dimension_numbers = #tpu.dot_dimension_numbers<[1], [0], [0], [1], [0, 0, 1, 1], [], []>} : vector<64x32xf32>, vector<32x128xf32>, vector<64x128xf32> -> vector<64x128xf32>
    %cst_5 = arith.constant dense<0.000000e+00> : vector<64x128xf32>
    %4 = tpu.matmul %0, %3, %cst_5 {dimension_numbers = #tpu.dot_dimension_numbers<[1], [0], [0], [1], [0, 0, 1, 1], [], []>} : vector<64x64xf32>, vector<64x128xf32>, vector<64x128xf32> -> vector<64x128xf32>
    %c0_6 = arith.constant 0 : index
    %c0_7 = arith.constant 0 : index
    %5 = vector.load %arg5[%c0_6, %c0_7] : memref<1x128xf32, #tpu.memory_space<vmem>>, vector<1x128xf32>
    %6 = vector.broadcast %5 : vector<1x128xf32> to vector<64x128xf32>
    %7 = arith.addf %4, %6 : vector<64x128xf32>
    %cst_8 = arith.constant 0.000000e+00 : f32
    %8 = vector.broadcast %cst_8 : f32 to vector<64x128xf32>
    %9 = arith.maximumf %7, %8 : vector<64x128xf32>
    %c0_9 = arith.constant 0 : index
    %c0_10 = arith.constant 0 : index
    %10 = vector.load %arg6[%c0_9, %c0_10] : memref<128x128xf32, #tpu.memory_space<vmem>>, vector<128x128xf32>
    %cst_11 = arith.constant dense<0.000000e+00> : vector<64x128xf32>
    %11 = tpu.matmul %9, %10, %cst_11 {dimension_numbers = #tpu.dot_dimension_numbers<[1], [0], [0], [1], [0, 0, 1, 1], [], []>} : vector<64x128xf32>, vector<128x128xf32>, vector<64x128xf32> -> vector<64x128xf32>
    %cst_12 = arith.constant dense<0.000000e+00> : vector<64x128xf32>
    %12 = tpu.matmul %0, %11, %cst_12 {dimension_numbers = #tpu.dot_dimension_numbers<[1], [0], [0], [1], [0, 0, 1, 1], [], []>} : vector<64x64xf32>, vector<64x128xf32>, vector<64x128xf32> -> vector<64x128xf32>
    %c0_13 = arith.constant 0 : index
    %c0_14 = arith.constant 0 : index
    %13 = vector.load %arg7[%c0_13, %c0_14] : memref<1x128xf32, #tpu.memory_space<vmem>>, vector<1x128xf32>
    %14 = vector.broadcast %13 : vector<1x128xf32> to vector<64x128xf32>
    %15 = arith.addf %12, %14 : vector<64x128xf32>
    %c0_15 = arith.constant 0 : index
    %c0_16 = arith.constant 0 : index
    %16 = vector.load %arg3[%c0_15, %c0_16] : memref<8x2xi32, #tpu.memory_space<vmem>>, vector<8x2xi32>
    %17 = vector.extract_strided_slice %16 {offsets = [0, 1], sizes = [8, 1], strides = [1, 1]} : vector<8x2xi32> to vector<8x1xi32>
    %c1_i32 = arith.constant 1 : i32
    %18 = vector.broadcast %c1_i32 : i32 to vector<8x1xi32>
    %19 = arith.subi %17, %18 : vector<8x1xi32>
    %20 = vector.extract_strided_slice %16 {offsets = [0, 0], sizes = [8, 1], strides = [1, 1]} : vector<8x2xi32> to vector<8x1xi32>
    %c1_i32_17 = arith.constant 1 : i32
    %21 = vector.broadcast %c1_i32_17 : i32 to vector<8x1xi32>
    %22 = arith.subi %20, %21 : vector<8x1xi32>
    %23 = tpu.iota {dimensions = array<i32: 1>} : vector<8x64xi32>
    %24 = vector.broadcast %19 : vector<8x1xi32> to vector<8x64xi32>
    %25 = arith.cmpi eq, %23, %24 : vector<8x64xi32>
    %26 = arith.extui %25 : vector<8x64xi1> to vector<8x64xi32>
    %27 = arith.sitofp %26 : vector<8x64xi32> to vector<8x64xf32>
    %28 = tpu.iota {dimensions = array<i32: 1>} : vector<8x32xi32>
    %29 = vector.broadcast %22 : vector<8x1xi32> to vector<8x32xi32>
    %30 = arith.cmpi eq, %28, %29 : vector<8x32xi32>
    %31 = arith.extui %30 : vector<8x32xi1> to vector<8x32xi32>
    %32 = arith.sitofp %31 : vector<8x32xi32> to vector<8x32xf32>
    %cst_18 = arith.constant dense<0.000000e+00> : vector<8x128xf32>
    %33 = tpu.matmul %27, %15, %cst_18 {dimension_numbers = #tpu.dot_dimension_numbers<[1], [0], [0], [1], [0, 0, 1, 1], [], []>} : vector<8x64xf32>, vector<64x128xf32>, vector<8x128xf32> -> vector<8x128xf32>
    %c0_19 = arith.constant 0 : index
    %c0_20 = arith.constant 0 : index
    %34 = vector.load %arg2[%c0_19, %c0_20] : memref<32x16xf32, #tpu.memory_space<vmem>>, vector<32x16xf32>
    %cst_21 = arith.constant dense<0.000000e+00> : vector<8x16xf32>
    %35 = tpu.matmul %32, %34, %cst_21 {dimension_numbers = #tpu.dot_dimension_numbers<[1], [0], [0], [1], [0, 0, 1, 1], [], []>} : vector<8x32xf32>, vector<32x16xf32>, vector<8x16xf32> -> vector<8x16xf32>
    %c0_22 = arith.constant 0 : index
    %c0_23 = arith.constant 0 : index
    %36 = vector.load %arg8[%c0_22, %c0_23] : memref<128x128xf32, #tpu.memory_space<vmem>>, vector<128x128xf32>
    %cst_24 = arith.constant dense<0.000000e+00> : vector<8x128xf32>
    %37 = tpu.matmul %33, %36, %cst_24 {dimension_numbers = #tpu.dot_dimension_numbers<[1], [0], [0], [1], [0, 0, 1, 1], [], []>} : vector<8x128xf32>, vector<128x128xf32>, vector<8x128xf32> -> vector<8x128xf32>
    %c0_25 = arith.constant 0 : index
    %c0_26 = arith.constant 0 : index
    %38 = vector.load %arg9[%c0_25, %c0_26] : memref<16x128xf32, #tpu.memory_space<vmem>>, vector<16x128xf32>
    %cst_27 = arith.constant dense<0.000000e+00> : vector<8x128xf32>
    %39 = tpu.matmul %35, %38, %cst_27 {dimension_numbers = #tpu.dot_dimension_numbers<[1], [0], [0], [1], [0, 0, 1, 1], [], []>} : vector<8x16xf32>, vector<16x128xf32>, vector<8x128xf32> -> vector<8x128xf32>
    %40 = arith.addf %37, %39 : vector<8x128xf32>
    %c0_28 = arith.constant 0 : index
    %c0_29 = arith.constant 0 : index
    %41 = vector.load %arg10[%c0_28, %c0_29] : memref<1x128xf32, #tpu.memory_space<vmem>>, vector<1x128xf32>
    %42 = vector.broadcast %41 : vector<1x128xf32> to vector<8x128xf32>
    %43 = arith.addf %40, %42 : vector<8x128xf32>
    %cst_30 = arith.constant 0.000000e+00 : f32
    %44 = vector.broadcast %cst_30 : f32 to vector<8x128xf32>
    %45 = arith.subf %44, %43 : vector<8x128xf32>
    %46 = math.exp %45 : vector<8x128xf32>
    %cst_31 = arith.constant 1.000000e+00 : f32
    %47 = vector.broadcast %cst_31 : f32 to vector<8x128xf32>
    %48 = arith.addf %47, %46 : vector<8x128xf32>
    %cst_32 = arith.constant 1.000000e+00 : f32
    %49 = vector.broadcast %cst_32 : f32 to vector<8x128xf32>
    %50 = arith.divf %49, %48 : vector<8x128xf32>
    %c0_33 = arith.constant 0 : index
    %c0_34 = arith.constant 0 : index
    %51 = vector.load %arg11[%c0_33, %c0_34] : memref<8x128xf32, #tpu.memory_space<vmem>>, vector<8x128xf32>
    tpu.vector_store %arg11[%c0_33, %c0_34], %50 {strides = array<i32>} : memref<8x128xf32, #tpu.memory_space<vmem>>, vector<8x128xf32>,
    return
  }
}

</mosaic_0001>

<llo_original>
// kernel: model_forward.1
$region0: #{model_forward.1}
  #allocation0 [shape = 'u32[]', space=smem, size = 0x4, offset = 0x4, fixed_abs, tag = 'smem constant byte address 0x4 - core index']
  #allocation1 [shape = 'u32[144,128]{1,0:T(1,128)}', space=vmem, size = 0x12000, scoped, tag = 'internal scratch']
  %s0 = inlined_call_operand.hbm [shape: f32[64,64], index: 0, kind: input, shape index: {}]
  %s1 = inlined_call_operand.vmem [shape: f32[64,32], index: 1, kind: input, shape index: {}]
  %s2 = inlined_call_operand.vmem [shape: f32[32,16], index: 2, kind: input, shape index: {}]
  %s3 = inlined_call_operand.vmem [shape: s32[8,2], index: 3, kind: input, shape index: {}]
  %s4 = inlined_call_operand.hbm [shape: f32[32,128], index: 4, kind: input, shape index: {}]
  %s5 = inlined_call_operand.hbm [shape: f32[1,128], index: 5, kind: input, shape index: {}]
  %s6 = inlined_call_operand.vmem [shape: f32[128,128], index: 6, kind: input, shape index: {}]
  %s7 = inlined_call_operand.hbm [shape: f32[1,128], index: 7, kind: input, shape index: {}]
  %s8 = inlined_call_operand.hbm [shape: f32[128,128], index: 8, kind: input, shape index: {}]
  %s9 = inlined_call_operand.hbm [shape: f32[16,128], index: 9, kind: input, shape index: {}]
  %s10 = inlined_call_operand.hbm [shape: f32[1,128], index: 10, kind: input, shape index: {}]
  %s11 = inlined_call_operand.vmem [shape: f32[8,128], index: 11, kind: output, shape index: {}]
  %s12 = sld [smem:[#allocation0]]
  $region82: #{model_forward.1} parent=0
    _
  %s14 = ssub.s32 1, %s12
  %s15 = scalar_select 0, %s14, %s12
  $region1: #{model_forward.1} parent=0
    #allocation2 [shape = 'u8[32768]{0}', space=vmem, size = 0x8000, scoped, tag = 'input window, operand 0, single buffered']
    #allocation3 [shape = 's32[1]{0}', space=sflag, size = 0x4, scoped, tag = 'scoped memory for model_forward.1']
    #allocation4 [shape = 'u8[16384]{0}', space=vmem, size = 0x4000, scoped, tag = 'input window, operand 4, single buffered']
    #allocation5 [shape = 's32[1]{0}', space=sflag, size = 0x4, scoped, tag = 'scoped memory for model_forward.1']
    #allocation6 [shape = 'u8[512]{0}', space=vmem, size = 0x400, scoped, tag = 'input window, operand 5, single buffered']
    #allocation7 [shape = 'u8[512]{0}', space=vmem, size = 0x400, scoped, tag = 'input window, operand 7, single buffered']
    #allocation8 [shape = 's32[1]{0}', space=sflag, size = 0x4, scoped, tag = 'scoped memory for model_forward.1']
    #allocation9 [shape = 'u8[65536]{0}', space=vmem, size = 0x10000, scoped, tag = 'input window, operand 8, single buffered']
    #allocation10 [shape = 'u8[8192]{0}', space=vmem, size = 0x2000, scoped, tag = 'input window, operand 9, single buffered']
    #allocation11 [shape = 's32[1]{0}', space=sflag, size = 0x4, scoped, tag = 'scoped memory for model_forward.1']
    #allocation12 [shape = 'u8[512]{0}', space=vmem, size = 0x400, scoped, tag = 'input window, operand 10, single buffered']
    %16 = vsyncpa [#allocation3], 0
    %17 = vsyncpa [#allocation5], 0
    %18 = vsyncpa [#allocation8], 0
    %19 = vsyncpa [#allocation11], 0
    // Predicated region
    $region2: #{model_forward.1} parent=1 // pred_check
      _
    $region3: #{model_forward.1} parent=1 // pred_check_branch
      %21 = sbr.rel (0) target = $region5
    $region4: #{model_forward.1} parent=1 // pred_region
      %s23 = ssub.s32 1024, 1024
      %24 = vsyncadd [#allocation3], %s23
      %s25 = sshll.u32 [#allocation2], 4
      %s26 = int_to_ptr.vmem [resolvable:$true] %s25
      %31 = dma.hbm_to_vmem [thread:$0]  %s0, 1024, %s26, [#allocation3], 128, 128, 8
    $region5: #{model_forward.1} parent=1 // pred_fallthru
      _
    // Predicated region
    $region6: #{model_forward.1} parent=1 // pred_check
      _
    $region7: #{model_forward.1} parent=1 // pred_check_branch
      %33 = sbr.rel (0) target = $region9
    $region8: #{model_forward.1} parent=1 // pred_region
      _
    $region9: #{model_forward.1} parent=1 // pred_fallthru
      _
    // Predicated region
    $region10: #{model_forward.1} parent=1 // pred_check
      _
    $region11: #{model_forward.1} parent=1 // pred_check_branch
      %35 = sbr.rel (0) target = $region13
    $region12: #{model_forward.1} parent=1 // pred_region
      _
    $region13: #{model_forward.1} parent=1 // pred_fallthru
      _
    // Predicated region
    $region14: #{model_forward.1} parent=1 // pred_check
      _
    $region15: #{model_forward.1} parent=1 // pred_check_branch
      %37 = sbr.rel (0) target = $region17
    $region16: #{model_forward.1} parent=1 // pred_region
      _
    $region17: #{model_forward.1} parent=1 // pred_fallthru
      _
    // Predicated region
    $region18: #{model_forward.1} parent=1 // pred_check
      _
    $region19: #{model_forward.1} parent=1 // pred_check_branch
      %39 = sbr.rel (0) target = $region21
    $region20: #{model_forward.1} parent=1 // pred_region
      %s41 = ssub.s32 512, 512
      %42 = vsyncadd [#allocation5], %s41
      %s43 = sshll.u32 [#allocation4], 4
      %s44 = int_to_ptr.vmem [resolvable:$true] %s43
      %49 = dma.hbm_to_vmem [thread:$0]  %s4, 512, %s44, [#allocation5], 128, 128, 8
    $region21: #{model_forward.1} parent=1 // pred_fallthru
      _
    // Predicated region
    $region22: #{model_forward.1} parent=1 // pred_check
      _
    $region23: #{model_forward.1} parent=1 // pred_check_branch
      %51 = sbr.rel (0) target = $region25
    $region24: #{model_forward.1} parent=1 // pred_region
      %s53 = ssub.s32 16, 16
      %54 = vsyncadd [#allocation5], %s53
      %s56 = sshll.u32 [#allocation6], 4
      %s57 = int_to_ptr.vmem [resolvable:$true] %s56
      %59 = dma.hbm_to_vmem [thread:$0]  %s5, 16, %s57, [#allocation5]
    $region25: #{model_forward.1} parent=1 // pred_fallthru
      _
    // Predicated region
    $region26: #{model_forward.1} parent=1 // pred_check
      _
    $region27: #{model_forward.1} parent=1 // pred_check_branch
      %61 = sbr.rel (0) target = $region29
    $region28: #{model_forward.1} parent=1 // pred_region
      _
    $region29: #{model_forward.1} parent=1 // pred_fallthru
      _
    // Predicated region
    $region30: #{model_forward.1} parent=1 // pred_check
      _
    $region31: #{model_forward.1} parent=1 // pred_check_branch
      %63 = sbr.rel (0) target = $region33
    $region32: #{model_forward.1} parent=1 // pred_region
      %s65 = ssub.s32 16, 16
      %66 = vsyncadd [#allocation8], %s65
      %s68 = sshll.u32 [#allocation7], 4
      %s69 = int_to_ptr.vmem [resolvable:$true] %s68
      %71 = dma.hbm_to_vmem [thread:$0]  %s7, 16, %s69, [#allocation8]
    $region33: #{model_forward.1} parent=1 // pred_fallthru
      _
    // Predicated region
    $region34: #{model_forward.1} parent=1 // pred_check
      _
    $region35: #{model_forward.1} parent=1 // pred_check_branch
      %73 = sbr.rel (0) target = $region37
    $region36: #{model_forward.1} parent=1 // pred_region
      %s75 = ssub.s32 2048, 2048
      %76 = vsyncadd [#allocation8], %s75
      %s77 = sshll.u32 [#allocation9], 4
      %s78 = int_to_ptr.vmem [resolvable:$true] %s77
      %83 = dma.hbm_to_vmem [thread:$0]  %s8, 2048, %s78, [#allocation8], 128, 128, 8
    $region37: #{model_forward.1} parent=1 // pred_fallthru
      _
    // Predicated region
    $region38: #{model_forward.1} parent=1 // pred_check
      _
    $region39: #{model_forward.1} parent=1 // pred_check_branch
      %85 = sbr.rel (0) target = $region41
    $region40: #{model_forward.1} parent=1 // pred_region
      %s87 = ssub.s32 256, 256
      %88 = vsyncadd [#allocation11], %s87
      %s89 = sshll.u32 [#allocation10], 4
      %s90 = int_to_ptr.vmem [resolvable:$true] %s89
      %95 = dma.hbm_to_vmem [thread:$0]  %s9, 256, %s90, [#allocation11], 128, 128, 8
    $region41: #{model_forward.1} parent=1 // pred_fallthru
      _
    // Predicated region
    $region42: #{model_forward.1} parent=1 // pred_check
      _
    $region43: #{model_forward.1} parent=1 // pred_check_branch
      %97 = sbr.rel (0) target = $region45
    $region44: #{model_forward.1} parent=1 // pred_region
      %s99 = ssub.s32 16, 16
      %100 = vsyncadd [#allocation11], %s99
      %s102 = sshll.u32 [#allocation12], 4
      %s103 = int_to_ptr.vmem [resolvable:$true] %s102
      %105 = dma.hbm_to_vmem [thread:$0]  %s10, 16, %s103, [#allocation11]
    $region45: #{model_forward.1} parent=1 // pred_fallthru
      _
    // Predicated region
    $region46: #{model_forward.1} parent=1 // pred_check
      _
    $region47: #{model_forward.1} parent=1 // pred_check_branch
      %107 = sbr.rel (0) target = $region49
    $region48: #{model_forward.1} parent=1 // pred_region
      %108 = dma.done [#allocation3], 1024
    $region49: #{model_forward.1} parent=1 // pred_fallthru
      _
    // Predicated region
    $region50: #{model_forward.1} parent=1 // pred_check
      _
    $region51: #{model_forward.1} parent=1 // pred_check_branch
      %110 = sbr.rel (0) target = $region53
    $region52: #{model_forward.1} parent=1 // pred_region
      %111 = dma.done [#allocation5], 512
    $region53: #{model_forward.1} parent=1 // pred_fallthru
      _
    // Predicated region
    $region54: #{model_forward.1} parent=1 // pred_check
      _
    $region55: #{model_forward.1} parent=1 // pred_check_branch
      %113 = sbr.rel (0) target = $region57
    $region56: #{model_forward.1} parent=1 // pred_region
      %114 = dma.done [#allocation5], 16
    $region57: #{model_forward.1} parent=1 // pred_fallthru
      _
    // Predicated region
    $region58: #{model_forward.1} parent=1 // pred_check
      _
    $region59: #{model_forward.1} parent=1 // pred_check_branch
      %116 = sbr.rel (0) target = $region61
    $region60: #{model_forward.1} parent=1 // pred_region
      %117 = dma.done [#allocation8], 16
    $region61: #{model_forward.1} parent=1 // pred_fallthru
      _
    // Predicated region
    $region62: #{model_forward.1} parent=1 // pred_check
      _
    $region63: #{model_forward.1} parent=1 // pred_check_branch
      %119 = sbr.rel (0) target = $region65
    $region64: #{model_forward.1} parent=1 // pred_region
      %120 = dma.done [#allocation8], 2048
    $region65: #{model_forward.1} parent=1 // pred_fallthru
      _
    // Predicated region
    $region66: #{model_forward.1} parent=1 // pred_check
      _
    $region67: #{model_forward.1} parent=1 // pred_check_branch
      %122 = sbr.rel (0) target = $region69
    $region68: #{model_forward.1} parent=1 // pred_region
      %123 = dma.done [#allocation11], 256
    $region69: #{model_forward.1} parent=1 // pred_fallthru
      _
    // Predicated region
    $region70: #{model_forward.1} parent=1 // pred_check
      _
    $region71: #{model_forward.1} parent=1 // pred_check_branch
      %125 = sbr.rel (0) target = $region73
    $region72: #{model_forward.1} parent=1 // pred_region
      %126 = dma.done [#allocation11], 16
    $region73: #{model_forward.1} parent=1 // pred_fallthru
      _
    %v127 = vld [vmem:[#allocation2] sm:$0xff]
    %v128 = vld [vmem:[#allocation2 + $0x8] sm:$0xff]
    %v129 = vld [vmem:[#allocation2 + $0x10] sm:$0xff]
    %v130 = vld [vmem:[#allocation2 + $0x18] sm:$0xff]
    %v131 = vld [vmem:[#allocation2 + $0x20] sm:$0xff]
    %v132 = vld [vmem:[#allocation2 + $0x28] sm:$0xff]
    %v133 = vld [vmem:[#allocation2 + $0x30] sm:$0xff]
    %v134 = vld [vmem:[#allocation2 + $0x38] sm:$0xff]
    %v135 = vld [vmem:[%s1] sm:$0xff]
    %v136 = vld [vmem:[%s1 + $0x8] sm:$0xff]
    %v137 = vld [vmem:[%s1 + $0x10] sm:$0xff]
    %v138 = vld [vmem:[%s1 + $0x18] sm:$0xff]
    %v139 = vld [vmem:[%s1 + $0x20] sm:$0xff]
    %v140 = vld [vmem:[%s1 + $0x28] sm:$0xff]
    %v141 = vld [vmem:[%s1 + $0x30] sm:$0xff]
    %v142 = vld [vmem:[%s1 + $0x38] sm:$0xff]
    %v143 = vld [vmem:[#allocation4] sm:$0xff]
    %v144 = vld [vmem:[#allocation4 + $0x8] sm:$0xff]
    %v145 = vld [vmem:[#allocation4 + $0x10] sm:$0xff]
    %v146 = vld [vmem:[#allocation4 + $0x18] sm:$0xff]
    %vm147 = vcmask 261120
    %v149 = vsel %vm147, %v135, 0
    %v152 = vsel %vm147, %v136, 0
    %v155 = vsel %vm147, %v137, 0
    %v158 = vsel %vm147, %v138, 0
    %v161 = vsel %vm147, %v139, 0
    %v164 = vsel %vm147, %v140, 0
    %v167 = vsel %vm147, %v141, 0
    %v170 = vsel %vm147, %v142, 0
    %172 = vmatprep.subr.mxu0 0.0
    %173 = vmatpush1.msra.mxu0 %v143
    %174 = vmatprep.subr.mxu0 0.0
    %175 = vmatpush1.msra.mxu0 %v144
    %176 = vmatprep.subr.mxu0 0.0
    %177 = vmatpush1.msra.mxu0 %v145
    %178 = vmatprep.subr.mxu0 0.0
    %179 = vmatpush1.msra.mxu0 %v146
    %180 = vmatprep.subr.mxu0 0.0
    %181 = vmatpush1.msra.mxu0 0.0
    %182 = vmatprep.subr.mxu0 0.0
    %183 = vmatpush1.msra.mxu0 0.0
    %184 = vmatprep.subr.mxu0 0.0
    %185 = vmatpush1.msra.mxu0 0.0
    %186 = vmatprep.subr.mxu0 0.0
    %187 = vmatpush1.msra.mxu0 0.0
    %188 = vmatprep.subr.mxu0 0.0
    %189 = vmatpush1.msra.mxu0 0.0
    %190 = vmatprep.subr.mxu0 0.0
    %191 = vmatpush1.msra.mxu0 0.0
    %192 = vmatprep.subr.mxu0 0.0
    %193 = vmatpush1.msra.mxu0 0.0
    %194 = vmatprep.subr.mxu0 0.0
    %195 = vmatpush1.msra.mxu0 0.0
    %196 = vmatprep.subr.mxu0 0.0
    %197 = vmatpush1.msra.mxu0 0.0
    %198 = vmatprep.subr.mxu0 0.0
    %199 = vmatpush1.msra.mxu0 0.0
    %200 = vmatprep.subr.mxu0 0.0
    %201 = vmatpush1.msra.mxu0 0.0
    %202 = vmatprep.subr.mxu0 0.0
    %203 = vmatpush1.msra.mxu0 0.0
    %204 = vmatprep.subr.mxu0 0.0
    %205 = vmatpush1.msra.mxu0 0.0
    %206 = vmatprep.subr.mxu0 0.0
    %207 = vmatpush1.msra.mxu0 0.0
    %208 = vmatprep.subr.mxu0 0.0
    %209 = vmatpush1.msra.mxu0 0.0
    %210 = vmatprep.subr.mxu0 0.0
    %211 = vmatpush1.msra.mxu0 0.0
    %212 = vmatprep.subr.mxu0 0.0
    %213 = vmatpush1.msra.mxu0 0.0
    %214 = vmatprep.subr.mxu0 0.0
    %215 = vmatpush1.msra.mxu0 0.0
    %216 = vmatprep.subr.mxu0 0.0
    %217 = vmatpush1.msra.mxu0 0.0
    %218 = vmatprep.subr.mxu0 0.0
    %219 = vmatpush1.msra.mxu0 0.0
    %220 = vmatprep.subr.mxu0 0.0
    %221 = vmatpush1.msra.mxu0 0.0
    %222 = vmatprep.subr.mxu0 0.0
    %223 = vmatpush1.msra.mxu0 0.0
    %224 = vmatprep.subr.mxu0 0.0
    %225 = vmatpush1.msra.mxu0 0.0
    %226 = vmatprep.subr.mxu0 0.0
    %227 = vmatpush1.msra.mxu0 0.0
    %228 = vmatprep.subr.mxu0 0.0
    %229 = vmatpush1.msra.mxu0 0.0
    %230 = vmatprep.subr.mxu0 0.0
    %231 = vmatpush1.msra.mxu0 0.0
    %232 = vmatprep.subr.mxu0 0.0
    %233 = vmatpush1.msra.mxu0 0.0
    %234 = vmatprep.subr.mxu0 0.0
    %235 = vmatpush1.msra.mxu0 0.0
    %236 = vmatprep.mubr.f32.mxu0 0.0
    %237 = vmatmul.mubr.f32.gmra.mrb[0].mxu0 %v149
    %v238 = vpop.f32.mrb[0].mxu0
    %v239 = vadd.f32 0.0, %v238
    %v240 = vpop.f32.mrb[0].mxu0
    %241 = vmatprep.mubr.f32.mxu0 0.0
    %242 = vmatmul.mubr.f32.gmra.mrb[0].mxu0 %v152
    %v243 = vpop.f32.mrb[0].mxu0
    %v244 = vadd.f32 0.0, %v243
    %v245 = vpop.f32.mrb[0].mxu0
    %246 = vmatprep.mubr.f32.mxu0 0.0
    %247 = vmatmul.mubr.f32.gmra.mrb[0].mxu0 %v155
    %v248 = vpop.f32.mrb[0].mxu0
    %v249 = vadd.f32 0.0, %v248
    %v250 = vpop.f32.mrb[0].mxu0
    %251 = vmatprep.mubr.f32.mxu0 0.0
    %252 = vmatmul.mubr.f32.gmra.mrb[0].mxu0 %v158
    %v253 = vpop.f32.mrb[0].mxu0
    %v254 = vadd.f32 0.0, %v253
    %v255 = vpop.f32.mrb[0].mxu0
    %256 = vmatprep.mubr.f32.mxu0 0.0
    %257 = vmatmul.mubr.f32.gmra.mrb[0].mxu0 %v161
    %v258 = vpop.f32.mrb[0].mxu0
    %v259 = vadd.f32 0.0, %v258
    %v260 = vpop.f32.mrb[0].mxu0
    %261 = vmatprep.mubr.f32.mxu0 0.0
    %262 = vmatmul.mubr.f32.gmra.mrb[0].mxu0 %v164
    %v263 = vpop.f32.mrb[0].mxu0
    %v264 = vadd.f32 0.0, %v263
    %v265 = vpop.f32.mrb[0].mxu0
    %266 = vmatprep.mubr.f32.mxu0 0.0
    %267 = vmatmul.mubr.f32.gmra.mrb[0].mxu0 %v167
    %v268 = vpop.f32.mrb[0].mxu0
    %v269 = vadd.f32 0.0, %v268
    %v270 = vpop.f32.mrb[0].mxu0
    %271 = vmatprep.mubr.f32.mxu0 0.0
    %272 = vmatmul.mubr.f32.gmra.mrb[0].mxu0 %v170
    %v273 = vpop.f32.mrb[0].mxu0
    %v274 = vadd.f32 0.0, %v273
    %v275 = vpop.f32.mrb[0].mxu0
    %276 = vdwg.mxu0
    %v277 = vld [vmem:[#allocation6] sm:$0x1]
    %v279 = vlaneseq
    %v280 = vshrl.u32 %v279, 7
    %v281 = vsub.s32 0, %v280
    %v282 = vrot.slane %v277, %v281
    %vm284 = vcmask 523264
    %v286 = vsel %vm284, %v127, 0
    %v289 = vsel %vm284, %v128, 0
    %v292 = vsel %vm284, %v129, 0
    %v295 = vsel %vm284, %v130, 0
    %v298 = vsel %vm284, %v131, 0
    %v301 = vsel %vm284, %v132, 0
    %v304 = vsel %vm284, %v133, 0
    %v307 = vsel %vm284, %v134, 0
    %309 = vmatprep.subr.mxu0 0.0
    %310 = vmatpush1.msra.mxu0 %v239
    %311 = vmatprep.subr.mxu0 0.0
    %312 = vmatpush1.msra.mxu0 %v244
    %313 = vmatprep.subr.mxu0 0.0
    %314 = vmatpush1.msra.mxu0 %v249
    %315 = vmatprep.subr.mxu0 0.0
    %316 = vmatpush1.msra.mxu0 %v254
    %317 = vmatprep.subr.mxu0 0.0
    %318 = vmatpush1.msra.mxu0 %v259
    %319 = vmatprep.subr.mxu0 0.0
    %320 = vmatpush1.msra.mxu0 %v264
    %321 = vmatprep.subr.mxu0 0.0
    %322 = vmatpush1.msra.mxu0 %v269
    %323 = vmatprep.subr.mxu0 0.0
    %324 = vmatpush1.msra.mxu0 %v274
    %325 = vmatprep.subr.mxu0 0.0
    %326 = vmatpush1.msra.mxu0 0.0
    %327 = vmatprep.subr.mxu0 0.0
    %328 = vmatpush1.msra.mxu0 0.0
    %329 = vmatprep.subr.mxu0 0.0
    %330 = vmatpush1.msra.mxu0 0.0
    %331 = vmatprep.subr.mxu0 0.0
    %332 = vmatpush1.msra.mxu0 0.0
    %333 = vmatprep.subr.mxu0 0.0
    %334 = vmatpush1.msra.mxu0 0.0
    %335 = vmatprep.subr.mxu0 0.0
    %336 = vmatpush1.msra.mxu0 0.0
    %337 = vmatprep.subr.mxu0 0.0
    %338 = vmatpush1.msra.mxu0 0.0
    %339 = vmatprep.subr.mxu0 0.0
    %340 = vmatpush1.msra.mxu0 0.0
    %341 = vmatprep.subr.mxu0 0.0
    %342 = vmatpush1.msra.mxu0 0.0
    %343 = vmatprep.subr.mxu0 0.0
    %344 = vmatpush1.msra.mxu0 0.0
    %345 = vmatprep.subr.mxu0 0.0
    %346 = vmatpush1.msra.mxu0 0.0
    %347 = vmatprep.subr.mxu0 0.0
    %348 = vmatpush1.msra.mxu0 0.0
    %349 = vmatprep.subr.mxu0 0.0
    %350 = vmatpush1.msra.mxu0 0.0
    %351 = vmatprep.subr.mxu0 0.0
    %352 = vmatpush1.msra.mxu0 0.0
    %353 = vmatprep.subr.mxu0 0.0
    %354 = vmatpush1.msra.mxu0 0.0
    %355 = vmatprep.subr.mxu0 0.0
    %356 = vmatpush1.msra.mxu0 0.0
    %357 = vmatprep.subr.mxu0 0.0
    %358 = vmatpush1.msra.mxu0 0.0
    %359 = vmatprep.subr.mxu0 0.0
    %360 = vmatpush1.msra.mxu0 0.0
    %361 = vmatprep.subr.mxu0 0.0
    %362 = vmatpush1.msra.mxu0 0.0
    %363 = vmatprep.subr.mxu0 0.0
    %364 = vmatpush1.msra.mxu0 0.0
    %365 = vmatprep.subr.mxu0 0.0
    %366 = vmatpush1.msra.mxu0 0.0
    %367 = vmatprep.subr.mxu0 0.0
    %368 = vmatpush1.msra.mxu0 0.0
    %369 = vmatprep.subr.mxu0 0.0
    %370 = vmatpush1.msra.mxu0 0.0
    %371 = vmatprep.subr.mxu0 0.0
    %372 = vmatpush1.msra.mxu0 0.0
    %373 = vmatprep.mubr.f32.mxu0 0.0
    %374 = vmatmul.mubr.f32.gmra.mrb[0].mxu0 %v286
    %v375 = vpop.f32.mrb[0].mxu0
    %v376 = vadd.f32 %v282, %v375
    %v377 = vpop.f32.mrb[0].mxu0
    %378 = vmatprep.mubr.f32.mxu0 0.0
    %379 = vmatmul.mubr.f32.gmra.mrb[0].mxu0 %v289
    %v380 = vpop.f32.mrb[0].mxu0
    %v381 = vadd.f32 %v282, %v380
    %v382 = vpop.f32.mrb[0].mxu0
    %383 = vmatprep.mubr.f32.mxu0 0.0
    %384 = vmatmul.mubr.f32.gmra.mrb[0].mxu0 %v292
    %v385 = vpop.f32.mrb[0].mxu0
    %v386 = vadd.f32 %v282, %v385
    %v387 = vpop.f32.mrb[0].mxu0
    %388 = vmatprep.mubr.f32.mxu0 0.0
    %389 = vmatmul.mubr.f32.gmra.mrb[0].mxu0 %v295
    %v390 = vpop.f32.mrb[0].mxu0
    %v391 = vadd.f32 %v282, %v390
    %v392 = vpop.f32.mrb[0].mxu0
    %393 = vmatprep.mubr.f32.mxu0 0.0
    %394 = vmatmul.mubr.f32.gmra.mrb[0].mxu0 %v298
    %v395 = vpop.f32.mrb[0].mxu0
    %v396 = vadd.f32 %v282, %v395
    %v397 = vpop.f32.mrb[0].mxu0
    %398 = vmatprep.mubr.f32.mxu0 0.0
    %399 = vmatmul.mubr.f32.gmra.mrb[0].mxu0 %v301
    %v400 = vpop.f32.mrb[0].mxu0
    %v401 = vadd.f32 %v282, %v400
    %v402 = vpop.f32.mrb[0].mxu0
    %403 = vmatprep.mubr.f32.mxu0 0.0
    %404 = vmatmul.mubr.f32.gmra.mrb[0].mxu0 %v304
    %v405 = vpop.f32.mrb[0].mxu0
    %v406 = vadd.f32 %v282, %v405
    %v407 = vpop.f32.mrb[0].mxu0
    %408 = vmatprep.mubr.f32.mxu0 0.0
    %409 = vmatmul.mubr.f32.gmra.mrb[0].mxu0 %v307
    %v410 = vpop.f32.mrb[0].mxu0
    %v411 = vadd.f32 %v282, %v410
    %v412 = vpop.f32.mrb[0].mxu0
    %413 = vdwg.mxu0
    %v414 = vmax.f32 %v376, 0.0
    %v415 = vmax.f32 %v381, 0.0
    %v416 = vmax.f32 %v386, 0.0
    %v417 = vmax.f32 %v391, 0.0
    %v418 = vmax.f32 %v396, 0.0
    %v419 = vmax.f32 %v401, 0.0
    %v420 = vmax.f32 %v406, 0.0
    %v421 = vmax.f32 %v411, 0.0
    %v422 = vld [vmem:[%s6] sm:$0xff]
    %v423 = vld [vmem:[%s6 + $0x8] sm:$0xff]
    %v424 = vld [vmem:[%s6 + $0x10] sm:$0xff]
    %v425 = vld [vmem:[%s6 + $0x18] sm:$0xff]
    %v426 = vld [vmem:[%s6 + $0x20] sm:$0xff]
    %v427 = vld [vmem:[%s6 + $0x28] sm:$0xff]
    %v428 = vld [vmem:[%s6 + $0x30] sm:$0xff]
    %v429 = vld [vmem:[%s6 + $0x38] sm:$0xff]
    %v430 = vld [vmem:[%s6 + $0x40] sm:$0xff]
    %v431 = vld [vmem:[%s6 + $0x48] sm:$0xff]
    %v432 = vld [vmem:[%s6 + $0x50] sm:$0xff]
    %v433 = vld [vmem:[%s6 + $0x58] sm:$0xff]
    %v434 = vld [vmem:[%s6 + $0x60] sm:$0xff]
    %v435 = vld [vmem:[%s6 + $0x68] sm:$0xff]
    %v436 = vld [vmem:[%s6 + $0x70] sm:$0xff]
    %v437 = vld [vmem:[%s6 + $0x78] sm:$0xff]
    %438 = vmatprep.subr.mxu0 0.0
    %439 = vmatpush1.msra.mxu0 %v422
    %440 = vmatprep.subr.mxu0 0.0
    %441 = vmatpush1.msra.mxu0 %v423
    %442 = vmatprep.subr.mxu0 0.0
    %443 = vmatpush1.msra.mxu0 %v424
    %444 = vmatprep.subr.mxu0 0.0
    %445 = vmatpush1.msra.mxu0 %v425
    %446 = vmatprep.subr.mxu0 0.0
    %447 = vmatpush1.msra.mxu0 %v426
    %448 = vmatprep.subr.mxu0 0.0
    %449 = vmatpush1.msra.mxu0 %v427
    %450 = vmatprep.subr.mxu0 0.0
    %451 = vmatpush1.msra.mxu0 %v428
    %452 = vmatprep.subr.mxu0 0.0
    %453 = vmatpush1.msra.mxu0 %v429
    %454 = vmatprep.subr.mxu0 0.0
    %455 = vmatpush1.msra.mxu0 %v430
    %456 = vmatprep.subr.mxu0 0.0
    %457 = vmatpush1.msra.mxu0 %v431
    %458 = vmatprep.subr.mxu0 0.0
    %459 = vmatpush1.msra.mxu0 %v432
    %460 = vmatprep.subr.mxu0 0.0
    %461 = vmatpush1.msra.mxu0 %v433
    %462 = vmatprep.subr.mxu0 0.0
    %463 = vmatpush1.msra.mxu0 %v434
    %464 = vmatprep.subr.mxu0 0.0
    %465 = vmatpush1.msra.mxu0 %v435
    %466 = vmatprep.subr.mxu0 0.0
    %467 = vmatpush1.msra.mxu0 %v436
    %468 = vmatprep.subr.mxu0 0.0
    %469 = vmatpush1.msra.mxu0 %v437
    %470 = vmatprep.subr.mxu0 0.0
    %471 = vmatpush1.msra.mxu0 0.0
    %472 = vmatprep.subr.mxu0 0.0
    %473 = vmatpush1.msra.mxu0 0.0
    %474 = vmatprep.subr.mxu0 0.0
    %475 = vmatpush1.msra.mxu0 0.0
    %476 = vmatprep.subr.mxu0 0.0
    %477 = vmatpush1.msra.mxu0 0.0
    %478 = vmatprep.subr.mxu0 0.0
    %479 = vmatpush1.msra.mxu0 0.0
    %480 = vmatprep.subr.mxu0 0.0
    %481 = vmatpush1.msra.mxu0 0.0
    %482 = vmatprep.subr.mxu0 0.0
    %483 = vmatpush1.msra.mxu0 0.0
    %484 = vmatprep.subr.mxu0 0.0
    %485 = vmatpush1.msra.mxu0 0.0
    %486 = vmatprep.subr.mxu0 0.0
    %487 = vmatpush1.msra.mxu0 0.0
    %488 = vmatprep.subr.mxu0 0.0
    %489 = vmatpush1.msra.mxu0 0.0
    %490 = vmatprep.subr.mxu0 0.0
    %491 = vmatpush1.msra.mxu0 0.0
    %492 = vmatprep.subr.mxu0 0.0
    %493 = vmatpush1.msra.mxu0 0.0
    %494 = vmatprep.subr.mxu0 0.0
    %495 = vmatpush1.msra.mxu0 0.0
    %496 = vmatprep.subr.mxu0 0.0
    %497 = vmatpush1.msra.mxu0 0.0
    %498 = vmatprep.subr.mxu0 0.0
    %499 = vmatpush1.msra.mxu0 0.0
    %500 = vmatprep.subr.mxu0 0.0
    %501 = vmatpush1.msra.mxu0 0.0
    %502 = vmatprep.mubr.f32.mxu0 0.0
    %503 = vmatmul.mubr.f32.gmra.mrb[0].mxu0 %v414
    %v504 = vpop.f32.mrb[0].mxu0
    %v505 = vadd.f32 0.0, %v504
    %v506 = vpop.f32.mrb[0].mxu0
    %507 = vmatprep.mubr.f32.mxu0 0.0
    %508 = vmatmul.mubr.f32.gmra.mrb[0].mxu0 %v415
    %v509 = vpop.f32.mrb[0].mxu0
    %v510 = vadd.f32 0.0, %v509
    %v511 = vpop.f32.mrb[0].mxu0
    %512 = vmatprep.mubr.f32.mxu0 0.0
    %513 = vmatmul.mubr.f32.gmra.mrb[0].mxu0 %v416
    %v514 = vpop.f32.mrb[0].mxu0
    %v515 = vadd.f32 0.0, %v514
    %v516 = vpop.f32.mrb[0].mxu0
    %517 = vmatprep.mubr.f32.mxu0 0.0
    %518 = vmatmul.mubr.f32.gmra.mrb[0].mxu0 %v417
    %v519 = vpop.f32.mrb[0].mxu0
    %v520 = vadd.f32 0.0, %v519
    %v521 = vpop.f32.mrb[0].mxu0
    %522 = vmatprep.mubr.f32.mxu0 0.0
    %523 = vmatmul.mubr.f32.gmra.mrb[0].mxu0 %v418
    %v524 = vpop.f32.mrb[0].mxu0
    %v525 = vadd.f32 0.0, %v524
    %v526 = vpop.f32.mrb[0].mxu0
    %527 = vmatprep.mubr.f32.mxu0 0.0
    %528 = vmatmul.mubr.f32.gmra.mrb[0].mxu0 %v419
    %v529 = vpop.f32.mrb[0].mxu0
    %v530 = vadd.f32 0.0, %v529
    %v531 = vpop.f32.mrb[0].mxu0
    %532 = vmatprep.mubr.f32.mxu0 0.0
    %533 = vmatmul.mubr.f32.gmra.mrb[0].mxu0 %v420
    %v534 = vpop.f32.mrb[0].mxu0
    %v535 = vadd.f32 0.0, %v534
    %v536 = vpop.f32.mrb[0].mxu0
    %537 = vmatprep.mubr.f32.mxu0 0.0
    %538 = vmatmul.mubr.f32.gmra.mrb[0].mxu0 %v421
    %v539 = vpop.f32.mrb[0].mxu0
    %v540 = vadd.f32 0.0, %v539
    %v541 = vpop.f32.mrb[0].mxu0
    %542 = vdwg.mxu0
    %v543 = vld [vmem:[#allocation7] sm:$0x1]
    %v545 = vlaneseq
    %v546 = vshrl.u32 %v545, 7
    %v547 = vsub.s32 0, %v546
    %v548 = vrot.slane %v543, %v547
    %550 = vmatprep.subr.mxu0 0.0
    %551 = vmatpush1.msra.mxu0 %v505
    %552 = vmatprep.subr.mxu0 0.0
    %553 = vmatpush1.msra.mxu0 %v510
    %554 = vmatprep.subr.mxu0 0.0
    %555 = vmatpush1.msra.mxu0 %v515
    %556 = vmatprep.subr.mxu0 0.0
    %557 = vmatpush1.msra.mxu0 %v520
    %558 = vmatprep.subr.mxu0 0.0
    %559 = vmatpush1.msra.mxu0 %v525
    %560 = vmatprep.subr.mxu0 0.0
    %561 = vmatpush1.msra.mxu0 %v530
    %562 = vmatprep.subr.mxu0 0.0
    %563 = vmatpush1.msra.mxu0 %v535
    %564 = vmatprep.subr.mxu0 0.0
    %565 = vmatpush1.msra.mxu0 %v540
    %566 = vmatprep.subr.mxu0 0.0
    %567 = vmatpush1.msra.mxu0 0.0
    %568 = vmatprep.subr.mxu0 0.0
    %569 = vmatpush1.msra.mxu0 0.0
    %570 = vmatprep.subr.mxu0 0.0
    %571 = vmatpush1.msra.mxu0 0.0
    %572 = vmatprep.subr.mxu0 0.0
    %573 = vmatpush1.msra.mxu0 0.0
    %574 = vmatprep.subr.mxu0 0.0
    %575 = vmatpush1.msra.mxu0 0.0
    %576 = vmatprep.subr.mxu0 0.0
    %577 = vmatpush1.msra.mxu0 0.0
    %578 = vmatprep.subr.mxu0 0.0
    %579 = vmatpush1.msra.mxu0 0.0
    %580 = vmatprep.subr.mxu0 0.0
    %581 = vmatpush1.msra.mxu0 0.0
    %582 = vmatprep.subr.mxu0 0.0
    %583 = vmatpush1.msra.mxu0 0.0
    %584 = vmatprep.subr.mxu0 0.0
    %585 = vmatpush1.msra.mxu0 0.0
    %586 = vmatprep.subr.mxu0 0.0
    %587 = vmatpush1.msra.mxu0 0.0
    %588 = vmatprep.subr.mxu0 0.0
    %589 = vmatpush1.msra.mxu0 0.0
    %590 = vmatprep.subr.mxu0 0.0
    %591 = vmatpush1.msra.mxu0 0.0
    %592 = vmatprep.subr.mxu0 0.0
    %593 = vmatpush1.msra.mxu0 0.0
    %594 = vmatprep.subr.mxu0 0.0
    %595 = vmatpush1.msra.mxu0 0.0
    %596 = vmatprep.subr.mxu0 0.0
    %597 = vmatpush1.msra.mxu0 0.0
    %598 = vmatprep.subr.mxu0 0.0
    %599 = vmatpush1.msra.mxu0 0.0
    %600 = vmatprep.subr.mxu0 0.0
    %601 = vmatpush1.msra.mxu0 0.0
    %602 = vmatprep.subr.mxu0 0.0
    %603 = vmatpush1.msra.mxu0 0.0
    %604 = vmatprep.subr.mxu0 0.0
    %605 = vmatpush1.msra.mxu0 0.0
    %606 = vmatprep.subr.mxu0 0.0
    %607 = vmatpush1.msra.mxu0 0.0
    %608 = vmatprep.subr.mxu0 0.0
    %609 = vmatpush1.msra.mxu0 0.0
    %610 = vmatprep.subr.mxu0 0.0
    %611 = vmatpush1.msra.mxu0 0.0
    %612 = vmatprep.subr.mxu0 0.0
    %613 = vmatpush1.msra.mxu0 0.0
    %614 = vmatprep.mubr.f32.mxu0 0.0
    %615 = vmatmul.mubr.f32.gmra.mrb[0].mxu0 %v286
    %v616 = vpop.f32.mrb[0].mxu0
    %v617 = vadd.f32 %v548, %v616
    %v618 = vpop.f32.mrb[0].mxu0
    %619 = vmatprep.mubr.f32.mxu0 0.0
    %620 = vmatmul.mubr.f32.gmra.mrb[0].mxu0 %v289
    %v621 = vpop.f32.mrb[0].mxu0
    %v622 = vadd.f32 %v548, %v621
    %v623 = vpop.f32.mrb[0].mxu0
    %624 = vmatprep.mubr.f32.mxu0 0.0
    %625 = vmatmul.mubr.f32.gmra.mrb[0].mxu0 %v292
    %v626 = vpop.f32.mrb[0].mxu0
    %v627 = vadd.f32 %v548, %v626
    %v628 = vpop.f32.mrb[0].mxu0
    %629 = vmatprep.mubr.f32.mxu0 0.0
    %630 = vmatmul.mubr.f32.gmra.mrb[0].mxu0 %v295
    %v631 = vpop.f32.mrb[0].mxu0
    %v632 = vadd.f32 %v548, %v631
    %v633 = vpop.f32.mrb[0].mxu0
    %634 = vmatprep.mubr.f32.mxu0 0.0
    %635 = vmatmul.mubr.f32.gmra.mrb[0].mxu0 %v298
    %v636 = vpop.f32.mrb[0].mxu0
    %v637 = vadd.f32 %v548, %v636
    %v638 = vpop.f32.mrb[0].mxu0
    %639 = vmatprep.mubr.f32.mxu0 0.0
    %640 = vmatmul.mubr.f32.gmra.mrb[0].mxu0 %v301
    %v641 = vpop.f32.mrb[0].mxu0
    %v642 = vadd.f32 %v548, %v641
    %v643 = vpop.f32.mrb[0].mxu0
    %644 = vmatprep.mubr.f32.mxu0 0.0
    %645 = vmatmul.mubr.f32.gmra.mrb[0].mxu0 %v304
    %v646 = vpop.f32.mrb[0].mxu0
    %v647 = vadd.f32 %v548, %v646
    %v648 = vpop.f32.mrb[0].mxu0
    %649 = vmatprep.mubr.f32.mxu0 0.0
    %650 = vmatmul.mubr.f32.gmra.mrb[0].mxu0 %v307
    %v651 = vpop.f32.mrb[0].mxu0
    %v652 = vadd.f32 %v548, %v651
    %v653 = vpop.f32.mrb[0].mxu0
    %654 = vdwg.mxu0
    %v655 = vld [vmem:[%s3] sm:$0xff]
    %v656 = vsub.s32 %v655, 1
    %v657 = vlaneseq
    %v658 = vand.u32 %v657, 127
    %659 = vset.pattern.permute.xlu0 1
    %660 = vperm.xlu0 %659, %v656
    %v661 = vpop.permute.xlu0 %660
    %vm662 = vcmp.eq.s32.totalorder %v658, %v661
    %v663 = vsel %vm662, 1, 0
    %v664 = vcvt.s32.f32 %v663
    %665 = vset.pattern.permute.xlu0 0
    %666 = vperm.xlu0 %665, %v656
    %v667 = vpop.permute.xlu0 %666
    %vm668 = vcmp.eq.s32.totalorder %v658, %v667
    %v669 = vsel %vm668, 1, 0
    %v670 = vcvt.s32.f32 %v669
    %v672 = vsel %vm284, %v664, 0
    %674 = vmatprep.subr.mxu0 0.0
    %675 = vmatpush1.msra.mxu0 %v617
    %676 = vmatprep.subr.mxu0 0.0
    %677 = vmatpush1.msra.mxu0 %v622
    %678 = vmatprep.subr.mxu0 0.0
    %679 = vmatpush1.msra.mxu0 %v627
    %680 = vmatprep.subr.mxu0 0.0
    %681 = vmatpush1.msra.mxu0 %v632
    %682 = vmatprep.subr.mxu0 0.0
    %683 = vmatpush1.msra.mxu0 %v637
    %684 = vmatprep.subr.mxu0 0.0
    %685 = vmatpush1.msra.mxu0 %v642
    %686 = vmatprep.subr.mxu0 0.0
    %687 = vmatpush1.msra.mxu0 %v647
    %688 = vmatprep.subr.mxu0 0.0
    %689 = vmatpush1.msra.mxu0 %v652
    %690 = vmatprep.subr.mxu0 0.0
    %691 = vmatpush1.msra.mxu0 0.0
    %692 = vmatprep.subr.mxu0 0.0
    %693 = vmatpush1.msra.mxu0 0.0
    %694 = vmatprep.subr.mxu0 0.0
    %695 = vmatpush1.msra.mxu0 0.0
    %696 = vmatprep.subr.mxu0 0.0
    %697 = vmatpush1.msra.mxu0 0.0
    %698 = vmatprep.subr.mxu0 0.0
    %699 = vmatpush1.msra.mxu0 0.0
    %700 = vmatprep.subr.mxu0 0.0
    %701 = vmatpush1.msra.mxu0 0.0
    %702 = vmatprep.subr.mxu0 0.0
    %703 = vmatpush1.msra.mxu0 0.0
    %704 = vmatprep.subr.mxu0 0.0
    %705 = vmatpush1.msra.mxu0 0.0
    %706 = vmatprep.subr.mxu0 0.0
    %707 = vmatpush1.msra.mxu0 0.0
    %708 = vmatprep.subr.mxu0 0.0
    %709 = vmatpush1.msra.mxu0 0.0
    %710 = vmatprep.subr.mxu0 0.0
    %711 = vmatpush1.msra.mxu0 0.0
    %712 = vmatprep.subr.mxu0 0.0
    %713 = vmatpush1.msra.mxu0 0.0
    %714 = vmatprep.subr.mxu0 0.0
    %715 = vmatpush1.msra.mxu0 0.0
    %716 = vmatprep.subr.mxu0 0.0
    %717 = vmatpush1.msra.mxu0 0.0
    %718 = vmatprep.subr.mxu0 0.0
    %719 = vmatpush1.msra.mxu0 0.0
    %720 = vmatprep.subr.mxu0 0.0
    %721 = vmatpush1.msra.mxu0 0.0
    %722 = vmatprep.subr.mxu0 0.0
    %723 = vmatpush1.msra.mxu0 0.0
    %724 = vmatprep.subr.mxu0 0.0
    %725 = vmatpush1.msra.mxu0 0.0
    %726 = vmatprep.subr.mxu0 0.0
    %727 = vmatpush1.msra.mxu0 0.0
    %728 = vmatprep.subr.mxu0 0.0
    %729 = vmatpush1.msra.mxu0 0.0
    %730 = vmatprep.subr.mxu0 0.0
    %731 = vmatpush1.msra.mxu0 0.0
    %732 = vmatprep.subr.mxu0 0.0
    %733 = vmatpush1.msra.mxu0 0.0
    %734 = vmatprep.subr.mxu0 0.0
    %735 = vmatpush1.msra.mxu0 0.0
    %736 = vmatprep.subr.mxu0 0.0
    %737 = vmatpush1.msra.mxu0 0.0
    %738 = vmatprep.mubr.f32.mxu0 0.0
    %739 = vmatmul.mubr.f32.gmra.mrb[0].mxu0 %v672
    %v740 = vpop.f32.mrb[0].mxu0
    %v741 = vadd.f32 0.0, %v740
    %v742 = vpop.f32.mrb[0].mxu0
    %743 = vdwg.mxu0
    %v744 = vld [vmem:[%s2] sm:$0xff]
    %v745 = vld [vmem:[%s2 + $0x8] sm:$0xff]
    %v746 = vld [vmem:[%s2 + $0x10] sm:$0xff]
    %v747 = vld [vmem:[%s2 + $0x18] sm:$0xff]
    %v749 = vsel %vm147, %v670, 0
    %751 = vmatprep.subr.mxu0 0.0
    %752 = vmatpush1.msra.mxu0 %v744
    %753 = vmatprep.subr.mxu0 0.0
    %754 = vmatpush1.msra.mxu0 %v745
    %755 = vmatprep.subr.mxu0 0.0
    %756 = vmatpush1.msra.mxu0 %v746
    %757 = vmatprep.subr.mxu0 0.0
    %758 = vmatpush1.msra.mxu0 %v747
    %759 = vmatprep.subr.mxu0 0.0
    %760 = vmatpush1.msra.mxu0 0.0
    %761 = vmatprep.subr.mxu0 0.0
    %762 = vmatpush1.msra.mxu0 0.0
    %763 = vmatprep.subr.mxu0 0.0
    %764 = vmatpush1.msra.mxu0 0.0
    %765 = vmatprep.subr.mxu0 0.0
    %766 = vmatpush1.msra.mxu0 0.0
    %767 = vmatprep.subr.mxu0 0.0
    %768 = vmatpush1.msra.mxu0 0.0
    %769 = vmatprep.subr.mxu0 0.0
    %770 = vmatpush1.msra.mxu0 0.0
    %771 = vmatprep.subr.mxu0 0.0
    %772 = vmatpush1.msra.mxu0 0.0
    %773 = vmatprep.subr.mxu0 0.0
    %774 = vmatpush1.msra.mxu0 0.0
    %775 = vmatprep.subr.mxu0 0.0
    %776 = vmatpush1.msra.mxu0 0.0
    %777 = vmatprep.subr.mxu0 0.0
    %778 = vmatpush1.msra.mxu0 0.0
    %779 = vmatprep.subr.mxu0 0.0
    %780 = vmatpush1.msra.mxu0 0.0
    %781 = vmatprep.subr.mxu0 0.0
    %782 = vmatpush1.msra.mxu0 0.0
    %783 = vmatprep.subr.mxu0 0.0
    %784 = vmatpush1.msra.mxu0 0.0
    %785 = vmatprep.subr.mxu0 0.0
    %786 = vmatpush1.msra.mxu0 0.0
    %787 = vmatprep.subr.mxu0 0.0
    %788 = vmatpush1.msra.mxu0 0.0
    %789 = vmatprep.subr.mxu0 0.0
    %790 = vmatpush1.msra.mxu0 0.0
    %791 = vmatprep.subr.mxu0 0.0
    %792 = vmatpush1.msra.mxu0 0.0
    %793 = vmatprep.subr.mxu0 0.0
    %794 = vmatpush1.msra.mxu0 0.0
    %795 = vmatprep.subr.mxu0 0.0
    %796 = vmatpush1.msra.mxu0 0.0
    %797 = vmatprep.subr.mxu0 0.0
    %798 = vmatpush1.msra.mxu0 0.0
    %799 = vmatprep.subr.mxu0 0.0
    %800 = vmatpush1.msra.mxu0 0.0
    %801 = vmatprep.subr.mxu0 0.0
    %802 = vmatpush1.msra.mxu0 0.0
    %803 = vmatprep.subr.mxu0 0.0
    %804 = vmatpush1.msra.mxu0 0.0
    %805 = vmatprep.subr.mxu0 0.0
    %806 = vmatpush1.msra.mxu0 0.0
    %807 = vmatprep.subr.mxu0 0.0
    %808 = vmatpush1.msra.mxu0 0.0
    %809 = vmatprep.subr.mxu0 0.0
    %810 = vmatpush1.msra.mxu0 0.0
    %811 = vmatprep.subr.mxu0 0.0
    %812 = vmatpush1.msra.mxu0 0.0
    %813 = vmatprep.subr.mxu0 0.0
    %814 = vmatpush1.msra.mxu0 0.0
    %815 = vmatprep.mubr.f32.mxu0 0.0
    %816 = vmatmul.mubr.f32.gmra.mrb[0].mxu0 %v749
    %v817 = vpop.f32.mrb[0].mxu0
    %v818 = vadd.f32 0.0, %v817
    %v819 = vpop.f32.mrb[0].mxu0
    %820 = vdwg.mxu0
    %v821 = vld [vmem:[#allocation9] sm:$0xff]
    %v822 = vld [vmem:[#allocation9 + $0x8] sm:$0xff]
    %v823 = vld [vmem:[#allocation9 + $0x10] sm:$0xff]
    %v824 = vld [vmem:[#allocation9 + $0x18] sm:$0xff]
    %v825 = vld [vmem:[#allocation9 + $0x20] sm:$0xff]
    %v826 = vld [vmem:[#allocation9 + $0x28] sm:$0xff]
    %v827 = vld [vmem:[#allocation9 + $0x30] sm:$0xff]
    %v828 = vld [vmem:[#allocation9 + $0x38] sm:$0xff]
    %v829 = vld [vmem:[#allocation9 + $0x40] sm:$0xff]
    %v830 = vld [vmem:[#allocation9 + $0x48] sm:$0xff]
    %v831 = vld [vmem:[#allocation9 + $0x50] sm:$0xff]
    %v832 = vld [vmem:[#allocation9 + $0x58] sm:$0xff]
    %v833 = vld [vmem:[#allocation9 + $0x60] sm:$0xff]
    %v834 = vld [vmem:[#allocation9 + $0x68] sm:$0xff]
    %v835 = vld [vmem:[#allocation9 + $0x70] sm:$0xff]
    %v836 = vld [vmem:[#allocation9 + $0x78] sm:$0xff]
    %v837 = vld [vmem:[#allocation10] sm:$0xff]
    %v838 = vld [vmem:[#allocation10 + $0x8] sm:$0xff]
    %vm839 = vcmask 130048
    %v841 = vsel %vm839, %v818, 0
    %843 = vmatprep.subr.mxu0 0.0
    %844 = vmatpush1.msra.mxu0 %v837
    %845 = vmatprep.subr.mxu0 0.0
    %846 = vmatpush1.msra.mxu0 %v838
    %847 = vmatprep.subr.mxu0 0.0
    %848 = vmatpush1.msra.mxu0 0.0
    %849 = vmatprep.subr.mxu0 0.0
    %850 = vmatpush1.msra.mxu0 0.0
    %851 = vmatprep.subr.mxu0 0.0
    %852 = vmatpush1.msra.mxu0 0.0
    %853 = vmatprep.subr.mxu0 0.0
    %854 = vmatpush1.msra.mxu0 0.0
    %855 = vmatprep.subr.mxu0 0.0
    %856 = vmatpush1.msra.mxu0 0.0
    %857 = vmatprep.subr.mxu0 0.0
    %858 = vmatpush1.msra.mxu0 0.0
    %859 = vmatprep.subr.mxu0 0.0
    %860 = vmatpush1.msra.mxu0 0.0
    %861 = vmatprep.subr.mxu0 0.0
    %862 = vmatpush1.msra.mxu0 0.0
    %863 = vmatprep.subr.mxu0 0.0
    %864 = vmatpush1.msra.mxu0 0.0
    %865 = vmatprep.subr.mxu0 0.0
    %866 = vmatpush1.msra.mxu0 0.0
    %867 = vmatprep.subr.mxu0 0.0
    %868 = vmatpush1.msra.mxu0 0.0
    %869 = vmatprep.subr.mxu0 0.0
    %870 = vmatpush1.msra.mxu0 0.0
    %871 = vmatprep.subr.mxu0 0.0
    %872 = vmatpush1.msra.mxu0 0.0
    %873 = vmatprep.subr.mxu0 0.0
    %874 = vmatpush1.msra.mxu0 0.0
    %875 = vmatprep.subr.mxu0 0.0
    %876 = vmatpush1.msra.mxu0 0.0
    %877 = vmatprep.subr.mxu0 0.0
    %878 = vmatpush1.msra.mxu0 0.0
    %879 = vmatprep.subr.mxu0 0.0
    %880 = vmatpush1.msra.mxu0 0.0
    %881 = vmatprep.subr.mxu0 0.0
    %882 = vmatpush1.msra.mxu0 0.0
    %883 = vmatprep.subr.mxu0 0.0
    %884 = vmatpush1.msra.mxu0 0.0
    %885 = vmatprep.subr.mxu0 0.0
    %886 = vmatpush1.msra.mxu0 0.0
    %887 = vmatprep.subr.mxu0 0.0
    %888 = vmatpush1.msra.mxu0 0.0
    %889 = vmatprep.subr.mxu0 0.0
    %890 = vmatpush1.msra.mxu0 0.0
    %891 = vmatprep.subr.mxu0 0.0
    %892 = vmatpush1.msra.mxu0 0.0
    %893 = vmatprep.subr.mxu0 0.0
    %894 = vmatpush1.msra.mxu0 0.0
    %895 = vmatprep.subr.mxu0 0.0
    %896 = vmatpush1.msra.mxu0 0.0
    %897 = vmatprep.subr.mxu0 0.0
    %898 = vmatpush1.msra.mxu0 0.0
    %899 = vmatprep.subr.mxu0 0.0
    %900 = vmatpush1.msra.mxu0 0.0
    %901 = vmatprep.subr.mxu0 0.0
    %902 = vmatpush1.msra.mxu0 0.0
    %903 = vmatprep.subr.mxu0 0.0
    %904 = vmatpush1.msra.mxu0 0.0
    %905 = vmatprep.subr.mxu0 0.0
    %906 = vmatpush1.msra.mxu0 0.0
    %907 = vmatprep.mubr.f32.mxu0 0.0
    %908 = vmatmul.mubr.f32.gmra.mrb[0].mxu0 %v841
    %v909 = vpop.f32.mrb[0].mxu0
    %v910 = vadd.f32 0.0, %v909
    %v911 = vpop.f32.mrb[0].mxu0
    %912 = vdwg.mxu0
    %913 = vmatprep.subr.mxu0 0.0
    %914 = vmatpush1.msra.mxu0 %v821
    %915 = vmatprep.subr.mxu0 0.0
    %916 = vmatpush1.msra.mxu0 %v822
    %917 = vmatprep.subr.mxu0 0.0
    %918 = vmatpush1.msra.mxu0 %v823
    %919 = vmatprep.subr.mxu0 0.0
    %920 = vmatpush1.msra.mxu0 %v824
    %921 = vmatprep.subr.mxu0 0.0
    %922 = vmatpush1.msra.mxu0 %v825
    %923 = vmatprep.subr.mxu0 0.0
    %924 = vmatpush1.msra.mxu0 %v826
    %925 = vmatprep.subr.mxu0 0.0
    %926 = vmatpush1.msra.mxu0 %v827
    %927 = vmatprep.subr.mxu0 0.0
    %928 = vmatpush1.msra.mxu0 %v828
    %929 = vmatprep.subr.mxu0 0.0
    %930 = vmatpush1.msra.mxu0 %v829
    %931 = vmatprep.subr.mxu0 0.0
    %932 = vmatpush1.msra.mxu0 %v830
    %933 = vmatprep.subr.mxu0 0.0
    %934 = vmatpush1.msra.mxu0 %v831
    %935 = vmatprep.subr.mxu0 0.0
    %936 = vmatpush1.msra.mxu0 %v832
    %937 = vmatprep.subr.mxu0 0.0
    %938 = vmatpush1.msra.mxu0 %v833
    %939 = vmatprep.subr.mxu0 0.0
    %940 = vmatpush1.msra.mxu0 %v834
    %941 = vmatprep.subr.mxu0 0.0
    %942 = vmatpush1.msra.mxu0 %v835
    %943 = vmatprep.subr.mxu0 0.0
    %944 = vmatpush1.msra.mxu0 %v836
    %945 = vmatprep.subr.mxu0 0.0
    %946 = vmatpush1.msra.mxu0 0.0
    %947 = vmatprep.subr.mxu0 0.0
    %948 = vmatpush1.msra.mxu0 0.0
    %949 = vmatprep.subr.mxu0 0.0
    %950 = vmatpush1.msra.mxu0 0.0
    %951 = vmatprep.subr.mxu0 0.0
    %952 = vmatpush1.msra.mxu0 0.0
    %953 = vmatprep.subr.mxu0 0.0
    %954 = vmatpush1.msra.mxu0 0.0
    %955 = vmatprep.subr.mxu0 0.0
    %956 = vmatpush1.msra.mxu0 0.0
    %957 = vmatprep.subr.mxu0 0.0
    %958 = vmatpush1.msra.mxu0 0.0
    %959 = vmatprep.subr.mxu0 0.0
    %960 = vmatpush1.msra.mxu0 0.0
    %961 = vmatprep.subr.mxu0 0.0
    %962 = vmatpush1.msra.mxu0 0.0
    %963 = vmatprep.subr.mxu0 0.0
    %964 = vmatpush1.msra.mxu0 0.0
    %965 = vmatprep.subr.mxu0 0.0
    %966 = vmatpush1.msra.mxu0 0.0
    %967 = vmatprep.subr.mxu0 0.0
    %968 = vmatpush1.msra.mxu0 0.0
    %969 = vmatprep.subr.mxu0 0.0
    %970 = vmatpush1.msra.mxu0 0.0
    %971 = vmatprep.subr.mxu0 0.0
    %972 = vmatpush1.msra.mxu0 0.0
    %973 = vmatprep.subr.mxu0 0.0
    %974 = vmatpush1.msra.mxu0 0.0
    %975 = vmatprep.subr.mxu0 0.0
    %976 = vmatpush1.msra.mxu0 0.0
    %977 = vmatprep.mubr.f32.mxu0 0.0
    %978 = vmatmul.mubr.f32.gmra.mrb[0].mxu0 %v741
    %v979 = vpop.f32.mrb[0].mxu0
    %v980 = vadd.f32 %v910, %v979
    %v981 = vpop.f32.mrb[0].mxu0
    %982 = vdwg.mxu0
    %v983 = vld [vmem:[#allocation12] sm:$0x1]
    %v985 = vlaneseq
    %v986 = vshrl.u32 %v985, 7
    %v987 = vsub.s32 0, %v986
    %v988 = vrot.slane %v983, %v987
    %v990 = vadd.f32 %v980, %v988
    %v991 = vsub.f32 0.0, %v990
    %v992 = vmul.f32 %v991, 1.442695
    %v993 = vpow.pop %v992
    %v994 = vadd.f32 %v993, 1.0
    %v995 = vrcp.pop %v994
    %v996 = vmul.f32 1.0, %v995
    %997 = vst [vmem:[%s11] sm:$0xff] %v996
    // Predicated region
    $region74: #{model_forward.1} parent=1 // pred_check
      _
    $region75: #{model_forward.1} parent=1 // pred_check_branch
      %999 = sbr.rel (0) target = $region77
    $region76: #{model_forward.1} parent=1 // pred_region
      _
    $region77: #{model_forward.1} parent=1 // pred_fallthru
      _
    // Predicated region
    $region78: #{model_forward.1} parent=1 // pred_check
      _
    $region79: #{model_forward.1} parent=1 // pred_check_branch
      %1001 = sbr.rel (0) target = $region81
    $region80: #{model_forward.1} parent=1 // pred_region
      _
    $region81: #{model_forward.1} parent=1 // pred_fallthru
      _
    %1002 = vsyncpa [#allocation3], 1
    %1003 = vsyncpa [#allocation5], 1
    %1004 = vsyncpa [#allocation8], 1
    %1005 = vsyncpa [#allocation11], 1

</llo_original>
